<compile_context>
chip_gen: v7x
topology: tpu7x:2x2x1
jax: 0.10.0
libtpu: 0.0.40
codegen_flags: <defaults>
</compile_context>

<pallas_src>
import functools

import jax
import jax.numpy as jnp
from jax import lax
from jax.experimental import pallas as pl
from jax.experimental.pallas import tpu as pltpu


def _cdiv(a: int, b: int) -> int:
    return -(-a // b)


def _vmem_capacity_bytes() -> int:
    """Per-generation VMEM capacity; conservative v7x default on failure."""
    try:
        cap = getattr(pltpu.get_tpu_info(), "vmem_capacity_bytes", None)
        if cap:
            return int(cap)
    except Exception:
        pass
    return 64 << 20


def _style_loss_kernel(feat_ref, target_ref, gram_ref, loss_ref, *,
                       scale, inv_n_gram, cd, tk, mask_lanes):
    """One K-tile of the Gram contraction; finalize (scale + MSE) on last tile.

    feat_ref:   (AB, TK)  streamed feature tile (input dtype preserved).
                The last tile may extend past cd; it is masked to zero here.
    target_ref: (AB, AB)  target Gram (already * weight), native dtype,
                constant index_map -> DMA'd once, resident across the grid.
    gram_ref:   (AB, AB)  f32 output block, resident across the grid; doubles
                as the accumulator.
    loss_ref:   (1, 1)    f32 MSE(G, target) (mean over ab*ab elements).
    """
    k = pl.program_id(0)
    nk = pl.num_programs(0)

    @pl.when(k == 0)
    def _init():
        gram_ref[...] = jnp.zeros_like(gram_ref)

    f = feat_ref[...]  # keep input dtype (bf16 stays bf16 on the MXU)
    if mask_lanes:
        # Static branch: only emitted when cd % tk != 0. Cheap VPU select that
        # zeroes the out-of-bounds lanes of the final (partial) K tile.
        col = k * tk + lax.broadcasted_iota(jnp.int32, f.shape, 1)
        f = jnp.where(col < cd, f, jnp.zeros_like(f))

    # G_partial = f @ f.T expressed directly (contract dim 1 with dim 1):
    # no transpose / re-layout of the streamed feature tile on the hot path.
    gram_ref[...] += lax.dot_general(
        f, f,
        dimension_numbers=(((1,), (1,)), ((), ())),
        preferred_element_type=jnp.float32,
    )

    @pl.when(k == nk - 1)
    def _finalize():
        g = gram_ref[...] * jnp.float32(scale)  # fused: weight / (a*b*c*d)
        gram_ref[...] = g
        diff = g - target_ref[...].astype(jnp.float32)
        loss_ref[...] = (jnp.sum(diff * diff) * jnp.float32(inv_n_gram)).reshape(1, 1)


def style_loss_forward(x, target, weight, *, tk=None):
    """Pallas equivalent of StyleLoss.forward.

    x:      (a, b, c, d) NCHW features (float32 or bfloat16).
    target: (a*b, a*b)   target Gram, already multiplied by weight
                         (as done in StyleLoss.__init__), any float dtype.
    weight: python float.
    tk:     optional K-tile width override (rounded up to a multiple of 128);
            by default tk is sized in bytes from the chip's VMEM capacity.

    Returns (output, G, loss): output == x (clone semantics),
    G == Gram(x) * weight (f32), loss == MSE(G, target) (f32 scalar).
    """
    a, b, c, d = x.shape
    ab, cd = a * b, c * d
    feats = x.reshape(ab, cd)          # input.view(a*b, c*d): free metadata op
    itemsize = feats.dtype.itemsize

    gram_bytes = ab * ab * 4
    target_bytes = ab * ab * target.dtype.itemsize
    vmem_cap = _vmem_capacity_bytes()

    # ---- K tile sizing (bytes-first) -------------------------------------
    lane_groups = _cdiv(cd, 128)                      # 128-lane columns of feats
    bytes_per_group = max(ab, 1) * 128 * itemsize
    if tk is None:
        budget = int(0.70 * vmem_cap)                 # leave compile headroom
        resident = 2 * gram_bytes + 2 * target_bytes  # double-buffer worst case
        feat_budget = max(budget - resident - (4 << 20), 1 << 20)
        per_block = max(feat_budget // 2, bytes_per_group)   # 2x (double-buffered)
        groups_per_tile = min(max(1, per_block // bytes_per_group), lane_groups)
    else:
        groups_per_tile = min(max(1, _cdiv(int(tk), 128)), lane_groups)
    nk = _cdiv(lane_groups, groups_per_tile)
    groups_per_tile = _cdiv(lane_groups, nk)          # even out tile sizes
    nk = _cdiv(lane_groups, groups_per_tile)
    tk = groups_per_tile * 128

    mask_lanes = (cd % tk) != 0                       # only the last tile is partial

    scale = float(weight) / float(a * b * c * d)      # .div(a*b*c*d) + .mul_(weight)
    inv_n_gram = 1.0 / float(ab * ab)                 # MSELoss 'mean'

    kernel = functools.partial(
        _style_loss_kernel,
        scale=scale, inv_n_gram=inv_n_gram, cd=cd, tk=tk, mask_lanes=mask_lanes)

    # ---- VMEM budget: actual residents + slack, capped below physical ----
    feat_block_bytes = ab * tk * itemsize
    need = 2 * feat_block_bytes + 2 * gram_bytes + 2 * target_bytes + (4 << 20)
    vmem_limit = int(min(max(need, 8 << 20), int(0.92 * vmem_cap)))

    cost = pl.CostEstimate(
        flops=2 * ab * ab * cd,
        transcendentals=0,
        bytes_accessed=int(feats.size * itemsize + target_bytes + gram_bytes + 4),
    )

    gram, loss = pl.pallas_call(
        kernel,
        out_shape=(
            jax.ShapeDtypeStruct((ab, ab), jnp.float32),
            jax.ShapeDtypeStruct((1, 1), jnp.float32),
        ),
        grid_spec=pltpu.PrefetchScalarGridSpec(
            num_scalar_prefetch=0,
            grid=(nk,),
            in_specs=[
                pl.BlockSpec((ab, tk), lambda k: (0, k)),   # streamed K tiles
                pl.BlockSpec((ab, ab), lambda k: (0, 0)),   # resident target
            ],
            out_specs=(
                pl.BlockSpec((ab, ab), lambda k: (0, 0)),   # resident Gram/acc
                pl.BlockSpec((1, 1), lambda k: (0, 0)),     # scalar loss
            ),
        ),
        compiler_params=pltpu.CompilerParams(
            dimension_semantics=("arbitrary",),             # K is a reduction axis
            vmem_limit_bytes=vmem_limit,
        ),
        cost_estimate=cost,
    )(feats, target)

    output = x  # input.clone(): JAX arrays are immutable, pass-through is a clone
    return output, gram, loss.reshape(())


def _gram_reference(x):
    a, b, c, d = x.shape
    f = x.reshape(a * b, c * d).astype(jnp.float32)
    return (f @ f.T) / float(a * b * c * d)


if __name__ == "__main__":
    key = jax.random.PRNGKey(0)
    k_in, k_style, k_in2, k_style2 = jax.random.split(key, 4)

    weight = 1000.0

    # ---- Case 1: canonical small shape, auto tile sizing (single K step) ----
    a, b, c, d = 2, 4, 16, 16  # (N, C, H, W)
    x = jax.random.normal(k_in, (a, b, c, d), dtype=jnp.float32)
    style_feat = jax.random.normal(k_style, (a, b, c, d), dtype=jnp.float32)
    target = (_gram_reference(style_feat) * weight).astype(jnp.float32)

    output, gram, loss = style_loss_forward(x, target, weight)
    jax.block_until_ready((output, gram, loss))

    gram_ref = _gram_reference(x) * weight
    loss_ref = jnp.mean((gram_ref - target) ** 2)
    assert jnp.allclose(output, x)
    assert jnp.allclose(gram, gram_ref, rtol=1e-5, atol=1e-4)
    assert jnp.allclose(loss, loss_ref, rtol=1e-4, atol=1e-3)

    # ---- Case 2: awkward spatial size + forced small tk ----------------------
    # Exercises the multi-tile accumulation path and the in-kernel lane masking
    # of the partial last K tile (cd = 324 is not a multiple of 128).
    a2, b2, c2, d2 = 2, 4, 18, 18
    x2 = jax.random.normal(k_in2, (a2, b2, c2, d2), dtype=jnp.float32)
    style2 = jax.random.normal(k_style2, (a2, b2, c2, d2), dtype=jnp.float32)
    target2 = (_gram_reference(style2) * weight).astype(jnp.float32)

    output2, gram2, loss2 = style_loss_forward(x2, target2, weight, tk=128)
    jax.block_until_ready((output2, gram2, loss2))

    gram2_ref = _gram_reference(x2) * weight
    loss2_ref = jnp.mean((gram2_ref - target2) ** 2)
    assert jnp.allclose(output2, x2)
    assert jnp.allclose(gram2, gram2_ref, rtol=1e-5, atol=1e-4)
    assert jnp.allclose(loss2, loss2_ref, rtol=1e-4, atol=1e-3)

    print("KERNEL_OK")
</pallas_src>

<mosaic_0001>
module attributes {stable_mosaic.version = 11 : i64} {
  func.func @_style_loss_kernel(%arg0: i32, %arg1: memref<8x256xf32, #tpu.memory_space<vmem>>, %arg2: memref<8x8xf32, #tpu.memory_space<vmem>>, %arg3: memref<8x8xf32, #tpu.memory_space<vmem>>, %arg4: memref<1x1xf32, #tpu.memory_space<vmem>>) attributes {dimension_semantics = [#tpu.dimension_semantics<arbitrary>], iteration_bounds = array<i64: 1>, scalar_prefetch = 0 : i64, scratch_operands = 0 : i64, tpu.core_type = #tpu.core_type<tc>, window_params = [{transform_indices = @transform_0, window_bounds = array<i64: 8, 256>}, {pipeline_mode = #tpu.pipeline_mode<synchronous>, transform_indices = @transform_1, window_bounds = array<i64: 8, 8>}, {pipeline_mode = #tpu.pipeline_mode<synchronous>, transform_indices = @transform_2, window_bounds = array<i64: 8, 8>}, {pipeline_mode = #tpu.pipeline_mode<synchronous>, transform_indices = @transform_3, window_bounds = array<i64: 1, 1>}]} {
    %c0_i32 = arith.constant 0 : i32
    %0 = arith.cmpi eq, %arg0, %c0_i32 : i32
    %1 = arith.extui %0 : i1 to i32
    %c0_i32_0 = arith.constant 0 : i32
    %2 = arith.cmpi ne, %1, %c0_i32_0 : i32
    scf.if %2 {
      %cst_8 = arith.constant 0.000000e+00 : f32
      %11 = vector.broadcast %cst_8 : f32 to vector<8x8xf32>
      %c0_9 = arith.constant 0 : index
      %c0_10 = arith.constant 0 : index
      %12 = vector.load %arg3[%c0_9, %c0_10] : memref<8x8xf32, #tpu.memory_space<vmem>>, vector<8x8xf32>
      tpu.vector_store %arg3[%c0_9, %c0_10], %11 {strides = array<i32>} : memref<8x8xf32, #tpu.memory_space<vmem>>, vector<8x8xf32>,
    } else {
    }
    %c0 = arith.constant 0 : index
    %c0_1 = arith.constant 0 : index
    %3 = vector.load %arg1[%c0, %c0_1] : memref<8x256xf32, #tpu.memory_space<vmem>>, vector<8x256xf32>
    %c0_2 = arith.constant 0 : index
    %c0_3 = arith.constant 0 : index
    %4 = vector.load %arg3[%c0_2, %c0_3] : memref<8x8xf32, #tpu.memory_space<vmem>>, vector<8x8xf32>
    %cst = arith.constant dense<0.000000e+00> : vector<8x8xf32>
    %5 = tpu.matmul %3, %3, %cst {dimension_numbers = #tpu.dot_dimension_numbers<[1], [1], [0], [0], [0, 0, 1, 0], [], []>} : vector<8x256xf32>, vector<8x256xf32>, vector<8x8xf32> -> vector<8x8xf32>
    %6 = arith.addf %4, %5 : vector<8x8xf32>
    %c0_4 = arith.constant 0 : index
    %c0_5 = arith.constant 0 : index
    %7 = vector.load %arg3[%c0_4, %c0_5] : memref<8x8xf32, #tpu.memory_space<vmem>>, vector<8x8xf32>
    tpu.vector_store %arg3[%c0_4, %c0_5], %6 {strides = array<i32>} : memref<8x8xf32, #tpu.memory_space<vmem>>, vector<8x8xf32>,
    %c0_i32_6 = arith.constant 0 : i32
    %8 = arith.cmpi eq, %arg0, %c0_i32_6 : i32
    %9 = arith.extui %8 : i1 to i32
    %c0_i32_7 = arith.constant 0 : i32
    %10 = arith.cmpi ne, %9, %c0_i32_7 : i32
    scf.if %10 {
      %c0_8 = arith.constant 0 : index
      %c0_9 = arith.constant 0 : index
      %11 = vector.load %arg3[%c0_8, %c0_9] : memref<8x8xf32, #tpu.memory_space<vmem>>, vector<8x8xf32>
      %cst_10 = arith.constant 0.48828125 : f32
      %12 = vector.broadcast %cst_10 : f32 to vector<8x8xf32>
      %13 = arith.mulf %11, %12 : vector<8x8xf32>
      %c0_11 = arith.constant 0 : index
      %c0_12 = arith.constant 0 : index
      %14 = vector.load %arg3[%c0_11, %c0_12] : memref<8x8xf32, #tpu.memory_space<vmem>>, vector<8x8xf32>
      tpu.vector_store %arg3[%c0_11, %c0_12], %13 {strides = array<i32>} : memref<8x8xf32, #tpu.memory_space<vmem>>, vector<8x8xf32>,
      %c0_13 = arith.constant 0 : index
      %c0_14 = arith.constant 0 : index
      %15 = vector.load %arg2[%c0_13, %c0_14] : memref<8x8xf32, #tpu.memory_space<vmem>>, vector<8x8xf32>
      %16 = arith.subf %13, %15 : vector<8x8xf32>
      %17 = arith.mulf %16, %16 : vector<8x8xf32>
      %18 = vector.shape_cast %17 : vector<8x8xf32> to vector<1x8x8xf32>
      %cst_15 = arith.constant dense<0.000000e+00> : vector<1xf32>
      %19 = vector.multi_reduction <add>, %18, %cst_15 [1, 2] : vector<1x8x8xf32> to vector<1xf32>
      %20 = vector.shape_cast %19 : vector<1xf32> to vector<1x1x1xf32>
      %21 = vector.extract %20[0, 0, 0] : f32 from vector<1x1x1xf32>
      %cst_16 = arith.constant 1.562500e-02 : f32
      %22 = arith.mulf %21, %cst_16 : f32
      %23 = vector.broadcast %22 : f32 to vector<1x1xf32>
      %c0_17 = arith.constant 0 : index
      %c0_18 = arith.constant 0 : index
      %24 = vector.load %arg4[%c0_17, %c0_18] : memref<1x1xf32, #tpu.memory_space<vmem>>, vector<1x1xf32>
      tpu.vector_store %arg4[%c0_17, %c0_18], %23 {strides = array<i32>} : memref<1x1xf32, #tpu.memory_space<vmem>>, vector<1x1xf32>,
    } else {
    }
    return
  }
  func.func @transform_0(%arg0: i32) -> (i32, i32) {
    %c0_i32 = arith.constant 0 : i32
    %c0_i32_0 = arith.constant 0 : i32
    return %c0_i32, %arg0 : i32, i32
  }
  func.func @transform_1(%arg0: i32) -> (i32, i32) {
    %c0_i32 = arith.constant 0 : i32
    %c0_i32_0 = arith.constant 0 : i32
    %c0_i32_1 = arith.constant 0 : i32
    return %c0_i32, %c0_i32_0 : i32, i32
  }
  func.func @transform_2(%arg0: i32) -> (i32, i32) {
    %c0_i32 = arith.constant 0 : i32
    %c0_i32_0 = arith.constant 0 : i32
    %c0_i32_1 = arith.constant 0 : i32
    return %c0_i32, %c0_i32_0 : i32, i32
  }
  func.func @transform_3(%arg0: i32) -> (i32, i32) {
    %c0_i32 = arith.constant 0 : i32
    %c0_i32_0 = arith.constant 0 : i32
    %c0_i32_1 = arith.constant 0 : i32
    return %c0_i32, %c0_i32_0 : i32, i32
  }
}

</mosaic_0001>

<llo_original>
// kernel: tpu_custom_call.1
$region0: #{tpu_custom_call.1}
  #allocation0 [shape = 'u32[]', space=smem, size = 0x4, offset = 0x4, fixed_abs, tag = 'smem constant byte address 0x4 - core index']
  #allocation1 [shape = 'u32[144,128]{1,0:T(1,128)}', space=vmem, size = 0x12000, scoped, tag = 'internal scratch']
  %s0 = inlined_call_operand.hbm [shape: f32[8,256], index: 0, kind: input, shape index: {}]
  %s1 = inlined_call_operand.hbm [shape: f32[8,8], index: 1, kind: input, shape index: {}]
  %s2 = inlined_call_operand.hbm [shape: f32[8,8], index: 2, kind: output, shape index: {0}]
  %s3 = inlined_call_operand.hbm [shape: f32[1,1], index: 3, kind: output, shape index: {1}]
  %4 = xla_tuple %s2, %s3
  %s5 = sld [smem:[#allocation0]]
  $region42: #{tpu_custom_call.1} parent=0
    _
  %s7 = ssub.s32 1, %s5
  %s8 = scalar_select 0, %s7, %s5
  $region1: #{tpu_custom_call.1} parent=0
    #allocation2 [shape = 'u8[8192]{0}', space=vmem, size = 0x2000, scoped, tag = 'input window, operand 0, single buffered']
    #allocation3 [shape = 's32[1]{0}', space=sflag, size = 0x4, scoped, tag = 'scoped memory for tpu_custom_call.1']
    #allocation4 [shape = 's32[1]{0}', space=sflag, size = 0x4, scoped, tag = 'scoped memory for tpu_custom_call.1']
    #allocation5 [shape = 'u8[4096]{0}', space=vmem, size = 0x1000, scoped, tag = 'input window, operand 1, single buffered']
    #allocation6 [shape = 's32[1]{0}', space=sflag, size = 0x4, scoped, tag = 'scoped memory for tpu_custom_call.1']
    #allocation7 [shape = 'u8[4096]{0}', space=vmem, size = 0x1000, scoped, tag = 'output window, operand 0, single buffered']
    #allocation8 [shape = 'u8[512]{0}', space=vmem, size = 0x400, scoped, tag = 'output window, operand 1, single buffered']
    #allocation9 [shape = 's32[1]{0}', space=sflag, size = 0x4, scoped, tag = 'scoped memory for tpu_custom_call.1']
    %9 = vsyncpa [#allocation3], 0
    %10 = vsyncpa [#allocation6], 0
    %11 = vsyncpa [#allocation4], 0
    %12 = vsyncpa [#allocation9], 0
    // Predicated region
    $region2: #{tpu_custom_call.1} parent=1 // pred_check
      _
    $region3: #{tpu_custom_call.1} parent=1 // pred_check_branch
      %14 = sbr.rel (0) target = $region5
    $region4: #{tpu_custom_call.1} parent=1 // pred_region
      %s16 = ssub.s32 256, 256
      %17 = vsyncadd [#allocation3], %s16
      %s19 = sshll.u32 [#allocation2], 4
      %s20 = int_to_ptr.vmem [resolvable:$true] %s19
      %22 = dma.hbm_to_vmem [thread:$0]  %s0, 256, %s20, [#allocation3]
    $region5: #{tpu_custom_call.1} parent=1 // pred_fallthru
      _
    // Predicated region
    $region6: #{tpu_custom_call.1} parent=1 // pred_check
      _
    $region7: #{tpu_custom_call.1} parent=1 // pred_check_branch
      %24 = sbr.rel (0) target = $region9
    $region8: #{tpu_custom_call.1} parent=1 // pred_region
      %s26 = ssub.s32 128, 128
      %27 = vsyncadd [#allocation6], %s26
      %s29 = sshll.u32 [#allocation5], 4
      %s30 = int_to_ptr.vmem [resolvable:$true] %s29
      %32 = dma.hbm_to_vmem [thread:$0]  %s1, 128, %s30, [#allocation6]
    $region9: #{tpu_custom_call.1} parent=1 // pred_fallthru
      _
    // Predicated region
    $region10: #{tpu_custom_call.1} parent=1 // pred_check
      _
    $region11: #{tpu_custom_call.1} parent=1 // pred_check_branch
      %34 = sbr.rel (0) target = $region13
    $region12: #{tpu_custom_call.1} parent=1 // pred_region
      %35 = dma.done [#allocation3], 256
    $region13: #{tpu_custom_call.1} parent=1 // pred_fallthru
      _
    // Predicated region
    $region14: #{tpu_custom_call.1} parent=1 // pred_check
      _
    $region15: #{tpu_custom_call.1} parent=1 // pred_check_branch
      %37 = sbr.rel (0) target = $region17
    $region16: #{tpu_custom_call.1} parent=1 // pred_region
      %38 = dma.done [#allocation6], 128
    $region17: #{tpu_custom_call.1} parent=1 // pred_fallthru
      _
    %p39 = scmp.eq.s32.totalorder 0, 0
    // Predicated region
    $region18: #{tpu_custom_call.1} parent=1 // pred_check
      %p40 = pneg %p39
    $region19: #{tpu_custom_call.1} parent=1 // pred_check_branch
      %42 = sbr.rel (%p40) target = $region21
    $region20: #{tpu_custom_call.1} parent=1 // pred_region
      %vm43 = vcmask 64512
      %44 = vst.msk [vmem:[#allocation7] sm:$0xff] %vm43, 0.0
    $region21: #{tpu_custom_call.1} parent=1 // pred_fallthru
      _
    %v45 = vld [vmem:[#allocation2] sm:$0xff]
    %v46 = vld [vmem:[#allocation2 + $0x8] sm:$0xff]
    %v47 = vld [vmem:[#allocation7] sm:$0xff]
    %48 = vmatprep.subr.mxu0 %v46
    %49 = vmatpush1.xpose.msra.mxu0 %v45
    %50 = vmatprep.subr.mxu0 0.0
    %51 = vmatpush1.xpose.msra.mxu0 0.0
    %52 = vmatprep.subr.mxu0 0.0
    %53 = vmatpush1.xpose.msra.mxu0 0.0
    %54 = vmatprep.subr.mxu0 0.0
    %55 = vmatpush1.xpose.msra.mxu0 0.0
    %56 = vmatprep.subr.mxu0 0.0
    %57 = vmatpush1.xpose.msra.mxu0 0.0
    %58 = vmatprep.subr.mxu0 0.0
    %59 = vmatpush1.xpose.msra.mxu0 0.0
    %60 = vmatprep.subr.mxu0 0.0
    %61 = vmatpush1.xpose.msra.mxu0 0.0
    %62 = vmatprep.subr.mxu0 0.0
    %63 = vmatpush1.xpose.msra.mxu0 0.0
    %64 = vmatprep.subr.mxu0 0.0
    %65 = vmatpush1.xpose.msra.mxu0 0.0
    %66 = vmatprep.subr.mxu0 0.0
    %67 = vmatpush1.xpose.msra.mxu0 0.0
    %68 = vmatprep.subr.mxu0 0.0
    %69 = vmatpush1.xpose.msra.mxu0 0.0
    %70 = vmatprep.subr.mxu0 0.0
    %71 = vmatpush1.xpose.msra.mxu0 0.0
    %72 = vmatprep.subr.mxu0 0.0
    %73 = vmatpush1.xpose.msra.mxu0 0.0
    %74 = vmatprep.subr.mxu0 0.0
    %75 = vmatpush1.xpose.msra.mxu0 0.0
    %76 = vmatprep.subr.mxu0 0.0
    %77 = vmatpush1.xpose.msra.mxu0 0.0
    %78 = vmatprep.subr.mxu0 0.0
    %79 = vmatpush1.xpose.msra.mxu0 0.0
    %80 = vmatprep.subr.mxu0 0.0
    %81 = vmatpush1.xpose.msra.mxu0 0.0
    %82 = vmatprep.subr.mxu0 0.0
    %83 = vmatpush1.xpose.msra.mxu0 0.0
    %84 = vmatprep.subr.mxu0 0.0
    %85 = vmatpush1.xpose.msra.mxu0 0.0
    %86 = vmatprep.subr.mxu0 0.0
    %87 = vmatpush1.xpose.msra.mxu0 0.0
    %88 = vmatprep.subr.mxu0 0.0
    %89 = vmatpush1.xpose.msra.mxu0 0.0
    %90 = vmatprep.subr.mxu0 0.0
    %91 = vmatpush1.xpose.msra.mxu0 0.0
    %92 = vmatprep.subr.mxu0 0.0
    %93 = vmatpush1.xpose.msra.mxu0 0.0
    %94 = vmatprep.subr.mxu0 0.0
    %95 = vmatpush1.xpose.msra.mxu0 0.0
    %96 = vmatprep.subr.mxu0 0.0
    %97 = vmatpush1.xpose.msra.mxu0 0.0
    %98 = vmatprep.subr.mxu0 0.0
    %99 = vmatpush1.xpose.msra.mxu0 0.0
    %100 = vmatprep.subr.mxu0 0.0
    %101 = vmatpush1.xpose.msra.mxu0 0.0
    %102 = vmatprep.subr.mxu0 0.0
    %103 = vmatpush1.xpose.msra.mxu0 0.0
    %104 = vmatprep.subr.mxu0 0.0
    %105 = vmatpush1.xpose.msra.mxu0 0.0
    %106 = vmatprep.subr.mxu0 0.0
    %107 = vmatpush1.xpose.msra.mxu0 0.0
    %108 = vmatprep.subr.mxu0 0.0
    %109 = vmatpush1.xpose.msra.mxu0 0.0
    %110 = vmatprep.subr.mxu0 0.0
    %111 = vmatpush1.xpose.msra.mxu0 0.0
    %112 = vmatprep.mubr.f32.mxu0 %v46
    %113 = vmatmul.mubr.f32.gmra.mrb[0].mxu0 %v45
    %v114 = vpop.f32.mrb[0].mxu0
    %v115 = vadd.f32 0.0, %v114
    %v116 = vpop.f32.mrb[0].mxu0
    %117 = vdwg.mxu0
    %v118 = vadd.f32 %v47, %v115
    %vm119 = vcmask 64512
    %120 = vst.msk [vmem:[#allocation7] sm:$0xff] %vm119, %v118
    // Predicated region
    $region22: #{tpu_custom_call.1} parent=1 // pred_check
      %p121 = pneg %p39
    $region23: #{tpu_custom_call.1} parent=1 // pred_check_branch
      %123 = sbr.rel (%p121) target = $region25
    $region24: #{tpu_custom_call.1} parent=1 // pred_region
      %v124 = vld [vmem:[#allocation7] sm:$0xff]
      %v125 = vmul.f32 %v124, 0.48828125
      %126 = vst.msk [vmem:[#allocation7] sm:$0xff] %vm119, %v125
      %v127 = vld [vmem:[#allocation5] sm:$0xff]
      %v128 = vsub.f32 %v125, %v127
      %v129 = vmul.f32 %v128, %v128
      %v130 = vsel %vm119, %v129, 0.0
      %131 = vadd.xlane.f32.xlu0 %v130
      %v132 = vpop.xlane.xlu0 %131
      %v133 = vrot.slane %v132, 4
      %v134 = vadd.f32 %v132, %v133
      %v135 = vrot.slane %v134, 2
      %v136 = vadd.f32 %v134, %v135
      %v137 = vrot.slane %v136, 1
      %v138 = vadd.f32 %v136, %v137
      %s139 = vtos %v138
      %s140 = smul.f32 %s139, 0.015625
      %v141 = vstv %s140
      %vm142 = vcmask 0
      %143 = vst.msk [vmem:[#allocation8] sm:$0x1] %vm142, %v141
    $region25: #{tpu_custom_call.1} parent=1 // pred_fallthru
      _
    // Predicated region
    $region26: #{tpu_custom_call.1} parent=1 // pred_check
      _
    $region27: #{tpu_custom_call.1} parent=1 // pred_check_branch
      %145 = sbr.rel (0) target = $region29
    $region28: #{tpu_custom_call.1} parent=1 // pred_region
      %s147 = ssub.s32 128, 128
      %148 = vsyncadd [#allocation4], %s147
      %s150 = sshll.u32 [#allocation7], 4
      %s151 = int_to_ptr.vmem [resolvable:$true] %s150
      %153 = dma.vmem_to_hbm [thread:$0]  %s151, 128, %s2, [#allocation4]
    $region29: #{tpu_custom_call.1} parent=1 // pred_fallthru
      _
    // Predicated region
    $region30: #{tpu_custom_call.1} parent=1 // pred_check
      _
    $region31: #{tpu_custom_call.1} parent=1 // pred_check_branch
      %155 = sbr.rel (0) target = $region33
    $region32: #{tpu_custom_call.1} parent=1 // pred_region
      %s157 = ssub.s32 16, 16
      %158 = vsyncadd [#allocation9], %s157
      %s160 = sshll.u32 [#allocation8], 4
      %s161 = int_to_ptr.vmem [resolvable:$true] %s160
      %163 = dma.vmem_to_hbm [thread:$0]  %s161, 16, %s3, [#allocation9]
    $region33: #{tpu_custom_call.1} parent=1 // pred_fallthru
      _
    // Predicated region
    $region34: #{tpu_custom_call.1} parent=1 // pred_check
      _
    $region35: #{tpu_custom_call.1} parent=1 // pred_check_branch
      %165 = sbr.rel (0) target = $region37
    $region36: #{tpu_custom_call.1} parent=1 // pred_region
      %166 = dma.done [#allocation4], 128
    $region37: #{tpu_custom_call.1} parent=1 // pred_fallthru
      _
    // Predicated region
    $region38: #{tpu_custom_call.1} parent=1 // pred_check
      _
    $region39: #{tpu_custom_call.1} parent=1 // pred_check_branch
      %168 = sbr.rel (0) target = $region41
    $region40: #{tpu_custom_call.1} parent=1 // pred_region
      %169 = dma.done [#allocation9], 16
    $region41: #{tpu_custom_call.1} parent=1 // pred_fallthru
      _
    %170 = vsyncpa [#allocation3], 1
    %171 = vsyncpa [#allocation6], 1
    %172 = vsyncpa [#allocation4], 1
    %173 = vsyncpa [#allocation9], 1

</llo_original>
